<compile_context>
chip_gen: v5e
topology: v5e:2x2
jax: 0.10.0
libtpu: 0.0.40
codegen_flags: <defaults>
</compile_context>

<pallas_src>
import jax
import jax.numpy as jnp
from jax import lax
from jax.experimental import pallas as pl
from jax.experimental.pallas import tpu as pltpu


# ---------------------------------------------------------------------------
# Fused attention kernel.  grid = (batch, query_tiles)
# ---------------------------------------------------------------------------
def _make_attention_kernel(C, c8, c2, HW, HWq, TQ):
    def kernel(gamma_ref, x_ref, wstk_ref, wo_ref, out_ref,
               theta_sc, phi_sc, g_sc):
        q = pl.program_id(1)
        q0 = pl.multiple_of(q * TQ, TQ)
        x_tile = x_ref[:, pl.ds(q0, TQ)]                 # (C, TQ) f32 residual

        @pl.when(gamma_ref[0] == 0.0)
        def _():
            # gamma is initialised to 0: out == x, skip all GEMMs / softmax.
            out_ref[...] = x_tile

        @pl.when(gamma_ref[0] != 0.0)
        def _():
            @pl.when(q == 0)
            def _():
                # One fused projection GEMM per image: [theta; phi; g] weights
                # stacked on rows, blocked spatial order on lanes.
                xb = x_ref[...].astype(jnp.bfloat16)                 # (C, HW)
                proj = jnp.dot(wstk_ref[...], xb,
                               preferred_element_type=jnp.float32)   # (2c8+c2, HW)

                def pool2x2(a):
                    # lanes hold the four 2x2-pool-neighbour sub-grids
                    # contiguously; conv1x1 -> maxpool2x2 == max over them.
                    r = a[:, 0:HWq]
                    for k in range(1, 4):
                        r = jnp.maximum(r, a[:, k * HWq:(k + 1) * HWq])
                    return r

                theta_sc[...] = proj[:c8, :].astype(jnp.bfloat16)          # (c8, HW)
                phi_sc[...] = pool2x2(proj[c8:2 * c8, :]).astype(jnp.bfloat16)  # (c8, HWq)
                g_sc[...] = pool2x2(proj[2 * c8:, :]).astype(jnp.bfloat16)      # (c2, HWq)

            theta_t = theta_sc[:, pl.ds(q0, TQ)]                     # (c8, TQ) bf16

            # Scores in key-major layout: only the tiny phi is contracted in
            # transposed form; the large theta is a canonical RHS.
            s_t = lax.dot_general(phi_sc[...], theta_t,
                                  (((0,), (0,)), ((), ())),
                                  preferred_element_type=jnp.float32)  # (HWq, TQ)

            # Online-style softmax pieces, kept in f32 (v5e VPU/EUP constraint).
            m = jnp.max(s_t, axis=0, keepdims=True)                  # (1, TQ)
            p = jnp.exp(s_t - m)
            l = jnp.sum(p, axis=0, keepdims=True)                    # (1, TQ)

            # Unnormalised value aggregation; softmax divide deferred to the
            # much smaller (c2, TQ) result via an approx EUP reciprocal.
            og = jnp.dot(g_sc[...], p.astype(jnp.bfloat16),
                         preferred_element_type=jnp.float32)          # (c2, TQ)
            og = og * pl.reciprocal(l, approx=True)
            o = jnp.dot(wo_ref[...], og.astype(jnp.bfloat16),
                        preferred_element_type=jnp.float32)           # (C, TQ)

            out_ref[...] = gamma_ref[0] * o + x_tile

    return kernel


# ---------------------------------------------------------------------------
# Wrapper: single pallas_call, single (pool-blocked) copy of x
# ---------------------------------------------------------------------------
def attention_forward(x, params, gamma, *, tq=128):
    N, C, H, W = x.shape
    assert C % 64 == 0, "kernel layout assumes C//8 is a multiple of 8 sublanes"
    assert H % 2 == 0 and W % 2 == 0
    c8, c2 = C // 8, C // 2
    HW, HWq = H * W, (H * W) // 4
    assert HWq % 128 == 0, "pooled spatial axis must be lane-aligned (128)"
    TQ = min(tq, HW)
    assert TQ % 128 == 0 and HW % TQ == 0

    w_theta, w_phi, w_g, w_o = params
    # bf16 weight feeds for the MXU (f32 accumulation in-kernel); theta/phi/g
    # stacked so the projection is a single GEMM.
    w_stack = jnp.concatenate([w_theta, w_phi, w_g], axis=0).astype(jnp.bfloat16)
    w_o_bf = w_o.astype(jnp.bfloat16)

    # Single copy of x, in 2x2-pool-blocked spatial order on lanes:
    #   lane index = (dh*2+dw)*HWq + (h'*(W/2)+w'),  (h, w) = (2h'+dh, 2w'+dw)
    # The whole kernel runs in this blocked query order (attention is
    # permutation-equivariant over queries); the output is un-permuted once.
    x_blk = (x.astype(jnp.float32)
              .reshape(N, C, H // 2, 2, W // 2, 2)
              .transpose(0, 1, 3, 5, 2, 4)
              .reshape(N, C, HW))
    gamma_arr = jnp.full((1,), gamma, dtype=jnp.float32)

    kernel = _make_attention_kernel(C, c8, c2, HW, HWq, TQ)
    out_blk = pl.pallas_call(
        kernel,
        out_shape=jax.ShapeDtypeStruct((N, C, HW), jnp.float32),
        grid=(N, HW // TQ),
        in_specs=[
            pl.BlockSpec((1,), lambda n, q: (0,),
                         memory_space=pltpu.MemorySpace.SMEM),      # gamma
            pl.BlockSpec((None, C, HW), lambda n, q: (n, 0, 0)),    # x (resident per image)
            pl.BlockSpec((2 * c8 + c2, C), lambda n, q: (0, 0)),    # stacked proj weights
            pl.BlockSpec((C, c2), lambda n, q: (0, 0)),             # w_o
        ],
        out_specs=pl.BlockSpec((None, C, TQ), lambda n, q: (n, 0, q)),
        scratch_shapes=[
            pltpu.VMEM((c8, HW), jnp.bfloat16),     # theta, all query tiles
            pltpu.VMEM((c8, HWq), jnp.bfloat16),    # pooled phi
            pltpu.VMEM((c2, HWq), jnp.bfloat16),    # pooled g
        ],
        compiler_params=pltpu.CompilerParams(
            # q must stay sequential per image (scratch filled at q == 0);
            # the batch axis is split across TensorCores on megacore parts.
            dimension_semantics=("parallel", "arbitrary"),
            vmem_limit_bytes=32 * 1024 * 1024,
        ),
    )(gamma_arr, x_blk, w_stack, w_o_bf)

    # Un-permute the blocked query order back to (H, W).
    out = (out_blk.reshape(N, C, 2, 2, H // 2, W // 2)
                  .transpose(0, 1, 4, 2, 5, 3)
                  .reshape(N, C, H, W))
    return out


# ---------------------------------------------------------------------------
# Parameter glue: spectral normalisation (1 power iteration) of 1x1 convs
# ---------------------------------------------------------------------------
def spectral_normalize(w, key, n_iters=1, eps=1e-12):
    u = jax.random.normal(key, (w.shape[0],), dtype=jnp.float32)
    u = u / (jnp.linalg.norm(u) + eps)
    v = None
    for _ in range(n_iters):
        v = w.T @ u
        v = v / (jnp.linalg.norm(v) + eps)
        u = w @ v
        u = u / (jnp.linalg.norm(u) + eps)
    sigma = u @ (w @ v)
    return w / sigma


def init_attention_params(key_w, key_u, ch):
    c8, c2 = ch // 8, ch // 2
    kw = jax.random.split(key_w, 4)
    ku = jax.random.split(key_u, 4)

    def sn_weight(k, k_u, cout, cin):
        w = 0.1 * jax.random.normal(k, (cout, cin), dtype=jnp.float32)
        return spectral_normalize(w, k_u)

    w_theta = sn_weight(kw[0], ku[0], c8, ch)   # 1x1 conv, bias=False
    w_phi = sn_weight(kw[1], ku[1], c8, ch)
    w_g = sn_weight(kw[2], ku[2], c2, ch)
    w_o = sn_weight(kw[3], ku[3], ch, c2)
    return (w_theta, w_phi, w_g, w_o)


# ---------------------------------------------------------------------------
# Pure-JAX f32 reference (for correctness check only)
# ---------------------------------------------------------------------------
def attention_reference(x, params, gamma):
    w_theta, w_phi, w_g, w_o = params
    N, C, H, W = x.shape
    xf = x.reshape(N, C, H * W)
    theta = jnp.einsum("oc,ncs->nos", w_theta, xf)
    phi_f = jnp.einsum("oc,ncs->nos", w_phi, xf).reshape(N, -1, H, W)
    g_f = jnp.einsum("oc,ncs->nos", w_g, xf).reshape(N, -1, H, W)

    def pool2x2(a):
        n, c = a.shape[:2]
        return (a.reshape(n, c, H // 2, 2, W // 2, 2)
                 .max(axis=(3, 5)).reshape(n, c, -1))

    phi = pool2x2(phi_f)
    g = pool2x2(g_f)
    s = jnp.einsum("nos,not->nst", theta, phi)
    beta = jax.nn.softmax(s, axis=-1)
    og = jnp.einsum("nct,nst->ncs", g, beta)
    o = jnp.einsum("oc,ncs->nos", w_o, og)
    return (gamma * o + xf).reshape(N, C, H, W)


# ---------------------------------------------------------------------------
if __name__ == "__main__":
    key = jax.random.PRNGKey(0)
    k_w, k_u, k_x = jax.random.split(key, 3)

    # ch must be a multiple of 64 for the fused-projection row slices; spatial
    # 32x32 keeps the pooled axis (HW/4 = 256) lane-aligned.
    N, C, H, W = 2, 64, 32, 32
    x = jax.random.normal(k_x, (N, C, H, W), dtype=jnp.float32)
    params = init_attention_params(k_w, k_u, C)

    # Module default: gamma = 0  =>  forward returns x exactly (residual f32).
    out0 = jax.block_until_ready(attention_forward(x, params, 0.0))
    assert out0.shape == (N, C, H, W), out0.shape
    assert bool(jnp.all(jnp.isfinite(out0)))
    assert bool(jnp.allclose(out0, x, atol=1e-6))

    # Full attention path (gamma = 1) against the pure-JAX f32 reference.
    # Tolerances account for bf16 MXU operands + approx softmax reciprocal.
    out1 = jax.block_until_ready(attention_forward(x, params, 1.0))
    ref1 = attention_reference(x, params, 1.0)
    err = float(jnp.max(jnp.abs(out1 - ref1)))
    rel = float(jnp.linalg.norm(out1 - ref1) / jnp.linalg.norm(ref1))
    assert rel < 2e-2, (rel, err)
    assert err < 1.5e-1, (rel, err)

    print("KERNEL_OK")
</pallas_src>

<mosaic_0001>
module attributes {stable_mosaic.version = 11 : i64} {
  func.func @kernel(%arg0: i32, %arg1: i32, %arg2: memref<1xf32, #tpu.memory_space<smem>>, %arg3: memref<1x64x1024xf32, #tpu.memory_space<vmem>>, %arg4: memref<48x64xbf16, #tpu.memory_space<vmem>>, %arg5: memref<64x32xbf16, #tpu.memory_space<vmem>>, %arg6: memref<1x64x128xf32, #tpu.memory_space<vmem>>, %arg7: memref<8x1024xbf16, #tpu.memory_space<vmem>>, %arg8: memref<8x256xbf16, #tpu.memory_space<vmem>>, %arg9: memref<32x256xbf16, #tpu.memory_space<vmem>>) attributes {dimension_semantics = [#tpu.dimension_semantics<parallel>, #tpu.dimension_semantics<arbitrary>], iteration_bounds = array<i64: 2, 8>, scalar_prefetch = 0 : i64, scratch_operands = 3 : i64, tpu.core_type = #tpu.core_type<tc>, window_params = [{transform_indices = @transform_0, window_bounds = array<i64: 1>}, {transform_indices = @transform_1, window_bounds = array<i64: 1, 64, 1024>}, {pipeline_mode = #tpu.pipeline_mode<synchronous>, transform_indices = @transform_2, window_bounds = array<i64: 48, 64>}, {pipeline_mode = #tpu.pipeline_mode<synchronous>, transform_indices = @transform_3, window_bounds = array<i64: 64, 32>}, {transform_indices = @transform_4, window_bounds = array<i64: 1, 64, 128>}]} {
    %c128_i32 = arith.constant 128 : i32
    %0 = arith.muli %arg1, %c128_i32 : i32
    %1 = tpu.assume_multiple %0, 128 : i32
    %c0 = arith.constant 0 : index
    %c0_0 = arith.constant 0 : index
    %2 = arith.index_cast %1 : i32 to index
    %3 = vector.load %arg3[%c0, %c0_0, %2] : memref<1x64x1024xf32, #tpu.memory_space<vmem>>, vector<1x64x128xf32>
    %4 = vector.shape_cast %3 : vector<1x64x128xf32> to vector<64x128xf32>
    %c0_1 = arith.constant 0 : index
    %5 = memref.load %arg2[%c0_1] : memref<1xf32, #tpu.memory_space<smem>>
    %cst = arith.constant 0.000000e+00 : f32
    %6 = arith.cmpf oeq, %5, %cst : f32
    %7 = arith.extui %6 : i1 to i32
    %c0_i32 = arith.constant 0 : i32
    %8 = arith.cmpi ne, %7, %c0_i32 : i32
    scf.if %8 {
      %c0_5 = arith.constant 0 : index
      %c0_6 = arith.constant 0 : index
      %c0_7 = arith.constant 0 : index
      %13 = vector.load %arg6[%c0_5, %c0_6, %c0_7] : memref<1x64x128xf32, #tpu.memory_space<vmem>>, vector<1x64x128xf32>
      %14 = vector.shape_cast %13 : vector<1x64x128xf32> to vector<64x128xf32>
      %15 = vector.shape_cast %4 : vector<64x128xf32> to vector<1x64x128xf32>
      tpu.vector_store %arg6[%c0_5, %c0_6, %c0_7], %15 {strides = array<i32>} : memref<1x64x128xf32, #tpu.memory_space<vmem>>, vector<1x64x128xf32>,
    } else {
    }
    %c0_2 = arith.constant 0 : index
    %9 = memref.load %arg2[%c0_2] : memref<1xf32, #tpu.memory_space<smem>>
    %cst_3 = arith.constant 0.000000e+00 : f32
    %10 = arith.cmpf one, %9, %cst_3 : f32
    %11 = arith.extui %10 : i1 to i32
    %c0_i32_4 = arith.constant 0 : i32
    %12 = arith.cmpi ne, %11, %c0_i32_4 : i32
    scf.if %12 {
      %c0_i32_5 = arith.constant 0 : i32
      %13 = arith.cmpi eq, %arg1, %c0_i32_5 : i32
      %14 = arith.extui %13 : i1 to i32
      %c0_i32_6 = arith.constant 0 : i32
      %15 = arith.cmpi ne, %14, %c0_i32_6 : i32
      scf.if %15 {
        %c0_23 = arith.constant 0 : index
        %c0_24 = arith.constant 0 : index
        %c0_25 = arith.constant 0 : index
        %43 = vector.load %arg3[%c0_23, %c0_24, %c0_25] : memref<1x64x1024xf32, #tpu.memory_space<vmem>>, vector<1x64x1024xf32>
        %44 = vector.shape_cast %43 : vector<1x64x1024xf32> to vector<64x1024xf32>
        %45 = arith.truncf %44 : vector<64x1024xf32> to vector<64x1024xbf16>
        %c0_26 = arith.constant 0 : index
        %c0_27 = arith.constant 0 : index
        %46 = vector.load %arg4[%c0_26, %c0_27] : memref<48x64xbf16, #tpu.memory_space<vmem>>, vector<48x64xbf16>
        %cst_28 = arith.constant dense<0.000000e+00> : vector<48x1024xf32>
        %47 = tpu.matmul %46, %45, %cst_28 {dimension_numbers = #tpu.dot_dimension_numbers<[1], [0], [0], [1], [0, 0, 1, 1], [], []>} : vector<48x64xbf16>, vector<64x1024xbf16>, vector<48x1024xf32> -> vector<48x1024xf32>
        %48 = vector.extract_strided_slice %47 {offsets = [0, 0], sizes = [8, 1024], strides = [1, 1]} : vector<48x1024xf32> to vector<8x1024xf32>
        %49 = arith.truncf %48 : vector<8x1024xf32> to vector<8x1024xbf16>
        %c0_29 = arith.constant 0 : index
        %c0_30 = arith.constant 0 : index
        %50 = vector.load %arg7[%c0_29, %c0_30] : memref<8x1024xbf16, #tpu.memory_space<vmem>>, vector<8x1024xbf16>
        tpu.vector_store %arg7[%c0_29, %c0_30], %49 {strides = array<i32>} : memref<8x1024xbf16, #tpu.memory_space<vmem>>, vector<8x1024xbf16>,
        %51 = vector.extract_strided_slice %47 {offsets = [8, 0], sizes = [8, 1024], strides = [1, 1]} : vector<48x1024xf32> to vector<8x1024xf32>
        %52 = vector.extract_strided_slice %51 {offsets = [0, 0], sizes = [8, 256], strides = [1, 1]} : vector<8x1024xf32> to vector<8x256xf32>
        %53 = vector.extract_strided_slice %51 {offsets = [0, 256], sizes = [8, 256], strides = [1, 1]} : vector<8x1024xf32> to vector<8x256xf32>
        %54 = arith.maximumf %52, %53 : vector<8x256xf32>
        %55 = vector.extract_strided_slice %51 {offsets = [0, 512], sizes = [8, 256], strides = [1, 1]} : vector<8x1024xf32> to vector<8x256xf32>
        %56 = arith.maximumf %54, %55 : vector<8x256xf32>
        %57 = vector.extract_strided_slice %51 {offsets = [0, 768], sizes = [8, 256], strides = [1, 1]} : vector<8x1024xf32> to vector<8x256xf32>
        %58 = arith.maximumf %56, %57 : vector<8x256xf32>
        %59 = arith.truncf %58 : vector<8x256xf32> to vector<8x256xbf16>
        %c0_31 = arith.constant 0 : index
        %c0_32 = arith.constant 0 : index
        %60 = vector.load %arg8[%c0_31, %c0_32] : memref<8x256xbf16, #tpu.memory_space<vmem>>, vector<8x256xbf16>
        tpu.vector_store %arg8[%c0_31, %c0_32], %59 {strides = array<i32>} : memref<8x256xbf16, #tpu.memory_space<vmem>>, vector<8x256xbf16>,
        %61 = vector.extract_strided_slice %47 {offsets = [16, 0], sizes = [32, 1024], strides = [1, 1]} : vector<48x1024xf32> to vector<32x1024xf32>
        %62 = vector.extract_strided_slice %61 {offsets = [0, 0], sizes = [32, 256], strides = [1, 1]} : vector<32x1024xf32> to vector<32x256xf32>
        %63 = vector.extract_strided_slice %61 {offsets = [0, 256], sizes = [32, 256], strides = [1, 1]} : vector<32x1024xf32> to vector<32x256xf32>
        %64 = arith.maximumf %62, %63 : vector<32x256xf32>
        %65 = vector.extract_strided_slice %61 {offsets = [0, 512], sizes = [32, 256], strides = [1, 1]} : vector<32x1024xf32> to vector<32x256xf32>
        %66 = arith.maximumf %64, %65 : vector<32x256xf32>
        %67 = vector.extract_strided_slice %61 {offsets = [0, 768], sizes = [32, 256], strides = [1, 1]} : vector<32x1024xf32> to vector<32x256xf32>
        %68 = arith.maximumf %66, %67 : vector<32x256xf32>
        %69 = arith.truncf %68 : vector<32x256xf32> to vector<32x256xbf16>
        %c0_33 = arith.constant 0 : index
        %c0_34 = arith.constant 0 : index
        %70 = vector.load %arg9[%c0_33, %c0_34] : memref<32x256xbf16, #tpu.memory_space<vmem>>, vector<32x256xbf16>
        tpu.vector_store %arg9[%c0_33, %c0_34], %69 {strides = array<i32>} : memref<32x256xbf16, #tpu.memory_space<vmem>>, vector<32x256xbf16>,
      } else {
      }
      %c0_7 = arith.constant 0 : index
      %16 = arith.index_cast %1 : i32 to index
      %17 = vector.load %arg7[%c0_7, %16] : memref<8x1024xbf16, #tpu.memory_space<vmem>>, vector<8x128xbf16>
      %c0_8 = arith.constant 0 : index
      %c0_9 = arith.constant 0 : index
      %18 = vector.load %arg8[%c0_8, %c0_9] : memref<8x256xbf16, #tpu.memory_space<vmem>>, vector<8x256xbf16>
      %cst_10 = arith.constant dense<0.000000e+00> : vector<256x128xf32>
      %19 = tpu.matmul %18, %17, %cst_10 {dimension_numbers = #tpu.dot_dimension_numbers<[0], [0], [1], [1], [0, 1, 1, 1], [], []>} : vector<8x256xbf16>, vector<8x128xbf16>, vector<256x128xf32> -> vector<256x128xf32>
      %cst_11 = arith.constant dense<0xFF800000> : vector<128xf32>
      %20 = vector.multi_reduction <maximumf>, %19, %cst_11 [0] : vector<256x128xf32> to vector<128xf32>
      %21 = vector.shape_cast %20 : vector<128xf32> to vector<1x128xf32>
      %22 = vector.broadcast %21 : vector<1x128xf32> to vector<256x128xf32>
      %23 = arith.subf %19, %22 : vector<256x128xf32>
      %24 = math.exp %23 : vector<256x128xf32>
      %cst_12 = arith.constant dense<0.000000e+00> : vector<128xf32>
      %25 = vector.multi_reduction <add>, %24, %cst_12 [0] : vector<256x128xf32> to vector<128xf32>
      %26 = vector.shape_cast %25 : vector<128xf32> to vector<1x128xf32>
      %c0_13 = arith.constant 0 : index
      %c0_14 = arith.constant 0 : index
      %27 = vector.load %arg9[%c0_13, %c0_14] : memref<32x256xbf16, #tpu.memory_space<vmem>>, vector<32x256xbf16>
      %28 = arith.truncf %24 : vector<256x128xf32> to vector<256x128xbf16>
      %cst_15 = arith.constant dense<0.000000e+00> : vector<32x128xf32>
      %29 = tpu.matmul %27, %28, %cst_15 {dimension_numbers = #tpu.dot_dimension_numbers<[1], [0], [0], [1], [0, 0, 1, 1], [], []>} : vector<32x256xbf16>, vector<256x128xbf16>, vector<32x128xf32> -> vector<32x128xf32>
      %30 = tpu.reciprocal %26 {approx = true} : vector<1x128xf32> -> vector<1x128xf32>
      %31 = vector.broadcast %30 : vector<1x128xf32> to vector<32x128xf32>
      %32 = arith.mulf %29, %31 : vector<32x128xf32>
      %c0_16 = arith.constant 0 : index
      %c0_17 = arith.constant 0 : index
      %33 = vector.load %arg5[%c0_16, %c0_17] : memref<64x32xbf16, #tpu.memory_space<vmem>>, vector<64x32xbf16>
      %34 = arith.truncf %32 : vector<32x128xf32> to vector<32x128xbf16>
      %cst_18 = arith.constant dense<0.000000e+00> : vector<64x128xf32>
      %35 = tpu.matmul %33, %34, %cst_18 {dimension_numbers = #tpu.dot_dimension_numbers<[1], [0], [0], [1], [0, 0, 1, 1], [], []>} : vector<64x32xbf16>, vector<32x128xbf16>, vector<64x128xf32> -> vector<64x128xf32>
      %c0_19 = arith.constant 0 : index
      %36 = memref.load %arg2[%c0_19] : memref<1xf32, #tpu.memory_space<smem>>
      %37 = vector.broadcast %36 : f32 to vector<64x128xf32>
      %38 = arith.mulf %37, %35 : vector<64x128xf32>
      %39 = arith.addf %38, %4 : vector<64x128xf32>
      %c0_20 = arith.constant 0 : index
      %c0_21 = arith.constant 0 : index
      %c0_22 = arith.constant 0 : index
      %40 = vector.load %arg6[%c0_20, %c0_21, %c0_22] : memref<1x64x128xf32, #tpu.memory_space<vmem>>, vector<1x64x128xf32>
      %41 = vector.shape_cast %40 : vector<1x64x128xf32> to vector<64x128xf32>
      %42 = vector.shape_cast %39 : vector<64x128xf32> to vector<1x64x128xf32>
      tpu.vector_store %arg6[%c0_20, %c0_21, %c0_22], %42 {strides = array<i32>} : memref<1x64x128xf32, #tpu.memory_space<vmem>>, vector<1x64x128xf32>,
    } else {
    }
    return
  }
  func.func @transform_0(%arg0: i32, %arg1: i32) -> i32 {
    %c0_i32 = arith.constant 0 : i32
    %c0_i32_0 = arith.constant 0 : i32
    return %c0_i32 : i32
  }
  func.func @transform_1(%arg0: i32, %arg1: i32) -> (i32, i32, i32) {
    %c0_i32 = arith.constant 0 : i32
    %c0_i32_0 = arith.constant 0 : i32
    %c0_i32_1 = arith.constant 0 : i32
    return %arg0, %c0_i32, %c0_i32_0 : i32, i32, i32
  }
  func.func @transform_2(%arg0: i32, %arg1: i32) -> (i32, i32) {
    %c0_i32 = arith.constant 0 : i32
    %c0_i32_0 = arith.constant 0 : i32
    %c0_i32_1 = arith.constant 0 : i32
    return %c0_i32, %c0_i32_0 : i32, i32
  }
  func.func @transform_3(%arg0: i32, %arg1: i32) -> (i32, i32) {
    %c0_i32 = arith.constant 0 : i32
    %c0_i32_0 = arith.constant 0 : i32
    %c0_i32_1 = arith.constant 0 : i32
    return %c0_i32, %c0_i32_0 : i32, i32
  }
  func.func @transform_4(%arg0: i32, %arg1: i32) -> (i32, i32, i32) {
    %c0_i32 = arith.constant 0 : i32
    %c0_i32_0 = arith.constant 0 : i32
    return %arg0, %c0_i32, %arg1 : i32, i32, i32
  }
}

</mosaic_0001>

<llo_original>
// kernel: tpu_custom_call.1
$region0: #{tpu_custom_call.1}
  #allocation0 [shape = 'u32[]', space=smem, size = 0x4, offset = 0x4, fixed_abs, tag = 'smem constant byte address 0x4 - core index']
  #allocation1 [shape = 'u32[72,128]{1,0:T(1,128)}', space=vmem, size = 0x9000, scoped, tag = 'internal scratch']
  #allocation2 [shape = 'bf16[8,1024]{1,0:T(8,128)(2,1)}', space=vmem, size = 0x4000, scoped, tag = 'scratch operand']
  #allocation3 [shape = 'bf16[8,256]{1,0:T(8,128)(2,1)}', space=vmem, size = 0x1000, scoped, tag = 'scratch operand']
  #allocation4 [shape = 'bf16[32,256]{1,0:T(8,128)(2,1)}', space=vmem, size = 0x4000, scoped, tag = 'scratch operand']
  #allocation5 [shape = 'f32[1]{0:T(128)S(6)}', space=smem, size = 0x200, scoped, tag = 'scoped memory for tpu_custom_call.1']
  %s0 = inlined_call_operand.<no memory space> [shape: f32[1], index: 0, kind: input, shape index: {}]
  %s1 = inlined_call_operand.hbm [shape: f32[2,64,1024], index: 1, kind: input, shape index: {}]
  %s2 = inlined_call_operand.vmem [shape: bf16[48,64], index: 2, kind: input, shape index: {}]
  %s3 = inlined_call_operand.vmem [shape: bf16[64,32], index: 3, kind: input, shape index: {}]
  %s4 = inlined_call_operand.hbm [shape: f32[2,64,1024], index: 4, kind: output, shape index: {}]
  %s5 = sld [smem:[#allocation0]]
  $region65: #{tpu_custom_call.1} parent=0
    _
  %s7 = ssub.s32 1, %s5
  %s8 = scalar_select 0, %s7, %s5
  %9 = sst [smem:[#allocation5]] %s0
  $region1: #{tpu_custom_call.1} parent=0
    #allocation6 [shape = 'u8[524288]{0}', space=vmem, size = 0x80000, scoped, tag = 'input window, operand 1']
    #allocation7 [shape = 's32[2]{0}', space=sflag, size = 0x8, scoped, tag = 'scoped memory for tpu_custom_call.1']
    #allocation8 [shape = 's32[2]{0}', space=sflag, size = 0x8, scoped, tag = 'scoped memory for tpu_custom_call.1']
    #allocation9 [shape = 'u8[65536]{0}', space=vmem, size = 0x10000, scoped, tag = 'output window, operand 0']
    %10 = vsyncpa [#allocation7], 0
    %s11 = scalar_lea.sflag [#allocation7], 1
    %12 = vsyncpa %s11, 0
    %13 = vsyncpa [#allocation8], 0
    %s14 = scalar_lea.sflag [#allocation8], 1
    %15 = vsyncpa %s14, 0
    loop: start=0, step=1, limit=18
    $region2: #{tpu_custom_call.1} parent=1 // loop_pre_header
      _
    $region3: #{tpu_custom_call.1} parent=1 // loop_header
      %s17 = sphi 0, %s21
      %p18 = scmp.ge.s32.totalorder %s17, 18
      %s24 = sphi 0, %s36
      %s25 = sphi 0, %s32
      %s26 = sphi 0, %s24
      %s27 = sphi 0, %s25
      %s28 = sphi 0, %s26
      %s29 = sphi 0, %s27
      %s37 = sphi 0, %s37
      %s39 = sphi 0, %s37
      %s40 = sphi 0, %s39
      %s54 = sphi 0, %s40
      %s60 = sphi 0, %s62
      %s63 = sphi 0, %s60
      %s64 = sphi 0, %s63
      %s80 = sphi 0, %s64
      %s84 = sphi 0, %s84
      %s86 = sphi 0, %s84
      %s87 = sphi 0, %s86
      %s101 = sphi 0, %s87
      %s105 = sphi 0, %s105
      %s107 = sphi 0, %s105
      %s108 = sphi 0, %s107
      %s122 = sphi 0, %s108
      %s130 = sphi 0, %s132
      %s133 = sphi 0, %s130
      %s134 = sphi 0, %s133
      %s150 = sphi 0, %s134
    $region4: #{tpu_custom_call.1} parent=1 // loop_header_branch
      %20 = sbr.rel (%p18) target = $region8
    $region5: #{tpu_custom_call.1} parent=1 // loop_body
      %s22 = ssub.s32 %s17, 1
      %s23 = ssub.s32 %s17, 2
      %s30 = sadd.s32 1, %s25
      %p31 = scmp.ge.s32.totalorder %s30, 8
      %s32 = scalar_select %p31, 0, %s30
      %s33 = sadd.s32 1, %s24
      %s34 = scalar_select %p31, %s33, %s24
      %p35 = scmp.ge.s32.totalorder %s34, 2
      %s36 = scalar_select %p35, 0, %s34
      %s38 = sadd.s32 %s37, 1
      %p41 = scmp.eq.s32.totalorder %s17, 15
      %p42 = scmp.ne.s32.totalorder %s37, %s39
      %p43 = scmp.eq.s32.totalorder %s17, 0
      %p44 = por %p42, %p43
      %p45 = scmp.ne.s32.totalorder %s37, %s39
      %p46 = scmp.eq.s32.totalorder %s22, 15
      %p47 = por %p45, %p46
      %p48 = scmp.ne.s32.totalorder %s39, %s40
      %p49 = scmp.eq.s32.totalorder %s22, 0
      %p50 = por %p48, %p49
      %p51 = scmp.ne.s32.totalorder %s39, %s40
      %p52 = scmp.eq.s32.totalorder %s23, 15
      %p53 = por %p51, %p52
      %p55 = scmp.ne.s32.totalorder %s40, %s54
      %p56 = scmp.eq.s32.totalorder %s23, 0
      %p57 = por %p55, %p56
      %s58 = ssub.s32 %s24, %s36
      %p59 = scmp.eq.s32.totalorder %s58, 0
      %s61 = sadd.s32 %s60, 1
      %s62 = scalar_select %p59, %s60, %s61
      %p65 = pneg %p59
      %p66 = scmp.eq.s32.totalorder %s17, 15
      %p67 = por %p65, %p66
      %p68 = scmp.ne.s32.totalorder %s60, %s63
      %p69 = scmp.eq.s32.totalorder %s17, 0
      %p70 = por %p68, %p69
      %p71 = scmp.ne.s32.totalorder %s60, %s63
      %p72 = scmp.eq.s32.totalorder %s22, 15
      %p73 = por %p71, %p72
      %p74 = scmp.ne.s32.totalorder %s63, %s64
      %p75 = scmp.eq.s32.totalorder %s22, 0
      %p76 = por %p74, %p75
      %p77 = scmp.ne.s32.totalorder %s63, %s64
      %p78 = scmp.eq.s32.totalorder %s23, 15
      %p79 = por %p77, %p78
      %p81 = scmp.ne.s32.totalorder %s64, %s80
      %p82 = scmp.eq.s32.totalorder %s23, 0
      %p83 = por %p81, %p82
      %s85 = sadd.s32 %s84, 1
      %p88 = scmp.eq.s32.totalorder %s17, 15
      %p89 = scmp.ne.s32.totalorder %s84, %s86
      %p90 = scmp.eq.s32.totalorder %s17, 0
      %p91 = por %p89, %p90
      %p92 = scmp.ne.s32.totalorder %s84, %s86
      %p93 = scmp.eq.s32.totalorder %s22, 15
      %p94 = por %p92, %p93
      %p95 = scmp.ne.s32.totalorder %s86, %s87
      %p96 = scmp.eq.s32.totalorder %s22, 0
      %p97 = por %p95, %p96
      %p98 = scmp.ne.s32.totalorder %s86, %s87
      %p99 = scmp.eq.s32.totalorder %s23, 15
      %p100 = por %p98, %p99
      %p102 = scmp.ne.s32.totalorder %s87, %s101
      %p103 = scmp.eq.s32.totalorder %s23, 0
      %p104 = por %p102, %p103
      %s106 = sadd.s32 %s105, 1
      %p109 = scmp.eq.s32.totalorder %s17, 15
      %p110 = scmp.ne.s32.totalorder %s105, %s107
      %p111 = scmp.eq.s32.totalorder %s17, 0
      %p112 = por %p110, %p111
      %p113 = scmp.ne.s32.totalorder %s105, %s107
      %p114 = scmp.eq.s32.totalorder %s22, 15
      %p115 = por %p113, %p114
      %p116 = scmp.ne.s32.totalorder %s107, %s108
      %p117 = scmp.eq.s32.totalorder %s22, 0
      %p118 = por %p116, %p117
      %p119 = scmp.ne.s32.totalorder %s107, %s108
      %p120 = scmp.eq.s32.totalorder %s23, 15
      %p121 = por %p119, %p120
      %p123 = scmp.ne.s32.totalorder %s108, %s122
      %p124 = scmp.eq.s32.totalorder %s23, 0
      %p125 = por %p123, %p124
      %s126 = ssub.s32 %s24, %s36
      %s127 = ssub.s32 %s25, %s32
      %s128 = sor.u32 %s126, %s127
      %p129 = scmp.eq.s32.totalorder %s128, 0
      %s131 = sadd.s32 %s130, 1
      %s132 = scalar_select %p129, %s130, %s131
      %p135 = pneg %p129
      %p136 = scmp.eq.s32.totalorder %s17, 15
      %p137 = por %p135, %p136
      %p138 = scmp.ne.s32.totalorder %s130, %s133
      %p139 = scmp.eq.s32.totalorder %s17, 0
      %p140 = por %p138, %p139
      %p141 = scmp.ne.s32.totalorder %s130, %s133
      %p142 = scmp.eq.s32.totalorder %s22, 15
      %p143 = por %p141, %p142
      %p144 = scmp.ne.s32.totalorder %s133, %s134
      %p145 = scmp.eq.s32.totalorder %s22, 0
      %p146 = por %p144, %p145
      %p147 = scmp.ne.s32.totalorder %s133, %s134
      %p148 = scmp.eq.s32.totalorder %s23, 15
      %p149 = por %p147, %p148
      %p151 = scmp.ne.s32.totalorder %s134, %s150
      %p152 = scmp.eq.s32.totalorder %s23, 0
      %p153 = por %p151, %p152
      %p154 = scmp.le.s32.totalorder 1, %s17
      %p155 = scmp.lt.s32.totalorder %s17, 17
      %p156 = pnand %p154, %p155
      %p157 = pneg %p156
      // Predicated region
      $region9: #{tpu_custom_call.1} parent=5 // pred_check
        _
      $region10: #{tpu_custom_call.1} parent=5 // pred_check_branch
        %159 = sbr.rel (%p156) target = $region12
      $region11: #{tpu_custom_call.1} parent=5 // pred_region
        %s160 = ssub.s32 %s17, 1
        // Predicated region
        $region13: #{tpu_custom_call.1} parent=11 // pred_check
          %p161 = pneg %p50
        $region14: #{tpu_custom_call.1} parent=11 // pred_check_branch
          %163 = sbr.rel (%p161) target = $region16
        $region15: #{tpu_custom_call.1} parent=11 // pred_region
          _
        $region16: #{tpu_custom_call.1} parent=11 // pred_fallthru
          _
        // Predicated region
        $region17: #{tpu_custom_call.1} parent=11 // pred_check
          %p164 = pneg %p97
        $region18: #{tpu_custom_call.1} parent=11 // pred_check_branch
          %166 = sbr.rel (%p164) target = $region20
        $region19: #{tpu_custom_call.1} parent=11 // pred_region
          _
        $region20: #{tpu_custom_call.1} parent=11 // pred_fallthru
          _
        // Predicated region
        $region21: #{tpu_custom_call.1} parent=11 // pred_check
          %p167 = pneg %p118
        $region22: #{tpu_custom_call.1} parent=11 // pred_check_branch
          %169 = sbr.rel (%p167) target = $region24
        $region23: #{tpu_custom_call.1} parent=11 // pred_region
          _
        $region24: #{tpu_custom_call.1} parent=11 // pred_fallthru
          _
      $region12: #{tpu_custom_call.1} parent=5 // pred_fallthru
        _
      %p170 = scmp.lt.s32.totalorder %s17, 16
      // Predicated region
      $region25: #{tpu_custom_call.1} parent=5 // pred_check
        %p171 = pneg %p170
      $region26: #{tpu_custom_call.1} parent=5 // pred_check_branch
        %173 = sbr.rel (%p171) target = $region28
      $region27: #{tpu_custom_call.1} parent=5 // pred_region
        // Predicated region
        $region29: #{tpu_custom_call.1} parent=27 // pred_check
          %p174 = pneg %p70
        $region30: #{tpu_custom_call.1} parent=27 // pred_check_branch
          %176 = sbr.rel (%p174) target = $region32
        $region31: #{tpu_custom_call.1} parent=27 // pred_region
          %s177 = sand.u32 %s60, 1
          %s178 = scalar_lea.sflag [#allocation7], %s177
          %s179 = sand.u32 %s60, 1
          %s180 = smul.addr %s179, 512
          %s181 = scalar_lea.vmem [#allocation6], %s180
          %183 = vsyncadd %s178, 0
          %s184 = smul.addr %s24, 64
          %s185 = smul.addr %s184, 8
          %s186 = scalar_lea.hbm %s1, %s185
          %s187 = sshll.u32 %s186, 4
          %s188 = int_to_ptr.hbm [resolvable:$true] %s187
          %s189 = sshll.u32 %s181, 4
          %s190 = int_to_ptr.vmem [resolvable:$true] %s189
          %195 = dma.hbm_to_vmem [thread:$0]  %s188, 8192, %s190, %s178, 1024, 1024, 64
        $region32: #{tpu_custom_call.1} parent=27 // pred_fallthru
          _
      $region28: #{tpu_custom_call.1} parent=5 // pred_fallthru
        _
      %p196 = scmp.le.s32.totalorder 1, %s17
      %p197 = scmp.lt.s32.totalorder %s17, 17
      %p198 = pnand %p196, %p197
      %p199 = pneg %p198
      // Predicated region
      $region33: #{tpu_custom_call.1} parent=5 // pred_check
        _
      $region34: #{tpu_custom_call.1} parent=5 // pred_check_branch
        %201 = sbr.rel (%p198) target = $region36
      $region35: #{tpu_custom_call.1} parent=5 // pred_region
        %s202 = ssub.s32 %s17, 1
        %s203 = sand.u32 %s63, 1
        %s204 = scalar_lea.sflag [#allocation7], %s203
        %s205 = sand.u32 %s63, 1
        %s206 = smul.addr %s205, 512
        %s207 = scalar_lea.vmem [#allocation6], %s206
        // Predicated region
        $region37: #{tpu_custom_call.1} parent=35 // pred_check
          %p208 = pneg %p76
        $region38: #{tpu_custom_call.1} parent=35 // pred_check_branch
          %210 = sbr.rel (%p208) target = $region40
        $region39: #{tpu_custom_call.1} parent=35 // pred_region
          %212 = dma.done %s204, 8192
        $region40: #{tpu_custom_call.1} parent=35 // pred_fallthru
          _
        %p213 = pneg %p50
        %p214 = pneg %p47
        %s215 = sand.u32 %s63, 1
        %s216 = scalar_lea.sflag [#allocation7], %s215
        %s217 = sand.u32 %s63, 1
        %s218 = smul.addr %s217, 512
        %s219 = scalar_lea.vmem [#allocation6], %s218
        %p220 = pneg %p76
        %p221 = pneg %p73
        %p222 = pneg %p97
        %p223 = pneg %p94
        %p224 = pneg %p118
        %p225 = pneg %p115
        %p226 = pneg %p146
        %p227 = pneg %p143
        %s228 = sand.u32 %s133, 1
        %s229 = scalar_lea.sflag [#allocation8], %s228
        %s230 = sand.u32 %s133, 1
        %s231 = smul.addr %s230, 64
        %s232 = scalar_lea.vmem [#allocation9], %s231
        %s234 = smul.u32 %s27, 128
        %s235 = sshra.s32 %s234, 7
        %s236 = sand.u32 %s234, 127
        %s237 = smul.addr %s235, 8
        %s238 = scalar_lea.vmem %s207, %s237 [#allocation6]
        %v239 = vld [vmem:[%s238] sm:$0xff]
        %v240 = vld [vmem:[%s238 + $0x40] sm:$0xff]
        %v241 = vld [vmem:[%s238 + $0x80] sm:$0xff]
        %v242 = vld [vmem:[%s238 + $0xc0] sm:$0xff]
        %v243 = vld [vmem:[%s238 + $0x100] sm:$0xff]
        %v244 = vld [vmem:[%s238 + $0x140] sm:$0xff]
        %v245 = vld [vmem:[%s238 + $0x180] sm:$0xff]
        %v246 = vld [vmem:[%s238 + $0x1c0] sm:$0xff]
        %s247 = sld [smem:[#allocation5]]
        %p248 = scmp.eq.f32.partialorder %s247, 0.0
        // Predicated region
        $region41: #{tpu_custom_call.1} parent=35 // pred_check
          %p249 = pneg %p248
        $region42: #{tpu_custom_call.1} parent=35 // pred_check_branch
          %251 = sbr.rel (%p249) target = $region44
        $region43: #{tpu_custom_call.1} parent=35 // pred_region
          %252 = vst [vmem:[%s232] sm:$0xff] %v239
          %253 = vst [vmem:[%s232 + $0x8] sm:$0xff] %v240
          %254 = vst [vmem:[%s232 + $0x10] sm:$0xff] %v241
          %255 = vst [vmem:[%s232 + $0x18] sm:$0xff] %v242
          %256 = vst [vmem:[%s232 + $0x20] sm:$0xff] %v243
          %257 = vst [vmem:[%s232 + $0x28] sm:$0xff] %v244
          %258 = vst [vmem:[%s232 + $0x30] sm:$0xff] %v245
          %259 = vst [vmem:[%s232 + $0x38] sm:$0xff] %v246
        $region44: #{tpu_custom_call.1} parent=35 // pred_fallthru
          _
        %s260 = sld [smem:[#allocation5]]
        %p261 = scmp.ne.f32.partialorder %s260, 0.0
        // Predicated region
        $region45: #{tpu_custom_call.1} parent=35 // pred_check
          %p262 = pneg %p261
        $region46: #{tpu_custom_call.1} parent=35 // pred_check_branch
          %264 = sbr.rel (%p262) target = $region48
        $region47: #{tpu_custom_call.1} parent=35 // pred_region
          %p265 = scmp.eq.s32.totalorder %s27, 0
          // Predicated region
          $region49: #{tpu_custom_call.1} parent=47 // pred_check
            %p266 = pneg %p265
          $region50: #{tpu_custom_call.1} parent=47 // pred_check_branch
            %268 = sbr.rel (%p266) target = $region52
          $region51: #{tpu_custom_call.1} parent=47 // pred_region
            %v269 = vld [vmem:[%s207] sm:$0xff]
            %v270 = vld [vmem:[%s207 + $0x8] sm:$0xff]
            %v271 = vld [vmem:[%s207 + $0x10] sm:$0xff]
            %v272 = vld [vmem:[%s207 + $0x18] sm:$0xff]
            %v273 = vld [vmem:[%s207 + $0x20] sm:$0xff]
            %v274 = vld [vmem:[%s207 + $0x28] sm:$0xff]
            %v275 = vld [vmem:[%s207 + $0x30] sm:$0xff]
            %v276 = vld [vmem:[%s207 + $0x38] sm:$0xff]
            %v277 = vld [vmem:[%s207 + $0x40] sm:$0xff]
            %v278 = vld [vmem:[%s207 + $0x48] sm:$0xff]
            %v279 = vld [vmem:[%s207 + $0x50] sm:$0xff]
            %v280 = vld [vmem:[%s207 + $0x58] sm:$0xff]
            %v281 = vld [vmem:[%s207 + $0x60] sm:$0xff]
            %v282 = vld [vmem:[%s207 + $0x68] sm:$0xff]
            %v283 = vld [vmem:[%s207 + $0x70] sm:$0xff]
            %v284 = vld [vmem:[%s207 + $0x78] sm:$0xff]
            %v285 = vld [vmem:[%s207 + $0x80] sm:$0xff]
            %v286 = vld [vmem:[%s207 + $0x88] sm:$0xff]
            %v287 = vld [vmem:[%s207 + $0x90] sm:$0xff]
            %v288 = vld [vmem:[%s207 + $0x98] sm:$0xff]
            %v289 = vld [vmem:[%s207 + $0xa0] sm:$0xff]
            %v290 = vld [vmem:[%s207 + $0xa8] sm:$0xff]
            %v291 = vld [vmem:[%s207 + $0xb0] sm:$0xff]
            %v292 = vld [vmem:[%s207 + $0xb8] sm:$0xff]
            %v293 = vld [vmem:[%s207 + $0xc0] sm:$0xff]
            %v294 = vld [vmem:[%s207 + $0xc8] sm:$0xff]
            %v295 = vld [vmem:[%s207 + $0xd0] sm:$0xff]
            %v296 = vld [vmem:[%s207 + $0xd8] sm:$0xff]
            %v297 = vld [vmem:[%s207 + $0xe0] sm:$0xff]
            %v298 = vld [vmem:[%s207 + $0xe8] sm:$0xff]
            %v299 = vld [vmem:[%s207 + $0xf0] sm:$0xff]
            %v300 = vld [vmem:[%s207 + $0xf8] sm:$0xff]
            %v301 = vld [vmem:[%s207 + $0x100] sm:$0xff]
            %v302 = vld [vmem:[%s207 + $0x108] sm:$0xff]
            %v303 = vld [vmem:[%s207 + $0x110] sm:$0xff]
            %v304 = vld [vmem:[%s207 + $0x118] sm:$0xff]
            %v305 = vld [vmem:[%s207 + $0x120] sm:$0xff]
            %v306 = vld [vmem:[%s207 + $0x128] sm:$0xff]
            %v307 = vld [vmem:[%s207 + $0x130] sm:$0xff]
            %v308 = vld [vmem:[%s207 + $0x138] sm:$0xff]
            %v309 = vld [vmem:[%s207 + $0x140] sm:$0xff]
            %v310 = vld [vmem:[%s207 + $0x148] sm:$0xff]
            %v311 = vld [vmem:[%s207 + $0x150] sm:$0xff]
            %v312 = vld [vmem:[%s207 + $0x158] sm:$0xff]
            %v313 = vld [vmem:[%s207 + $0x160] sm:$0xff]
            %v314 = vld [vmem:[%s207 + $0x168] sm:$0xff]
            %v315 = vld [vmem:[%s207 + $0x170] sm:$0xff]
            %v316 = vld [vmem:[%s207 + $0x178] sm:$0xff]
            %v317 = vld [vmem:[%s207 + $0x180] sm:$0xff]
            %v318 = vld [vmem:[%s207 + $0x188] sm:$0xff]
            %v319 = vld [vmem:[%s207 + $0x190] sm:$0xff]
            %v320 = vld [vmem:[%s207 + $0x198] sm:$0xff]
            %v321 = vld [vmem:[%s207 + $0x1a0] sm:$0xff]
            %v322 = vld [vmem:[%s207 + $0x1a8] sm:$0xff]
            %v323 = vld [vmem:[%s207 + $0x1b0] sm:$0xff]
            %v324 = vld [vmem:[%s207 + $0x1b8] sm:$0xff]
            %v325 = vld [vmem:[%s207 + $0x1c0] sm:$0xff]
            %v326 = vld [vmem:[%s207 + $0x1c8] sm:$0xff]
            %v327 = vld [vmem:[%s207 + $0x1d0] sm:$0xff]
            %v328 = vld [vmem:[%s207 + $0x1d8] sm:$0xff]
            %v329 = vld [vmem:[%s207 + $0x1e0] sm:$0xff]
            %v330 = vld [vmem:[%s207 + $0x1e8] sm:$0xff]
            %v331 = vld [vmem:[%s207 + $0x1f0] sm:$0xff]
            %v332 = vld [vmem:[%s207 + $0x1f8] sm:$0xff]
            %v333 = vpack.c.bf16 %v277, %v269
            %v334 = vpack.c.bf16 %v278, %v270
            %v335 = vpack.c.bf16 %v279, %v271
            %v336 = vpack.c.bf16 %v280, %v272
            %v337 = vpack.c.bf16 %v281, %v273
            %v338 = vpack.c.bf16 %v282, %v274
            %v339 = vpack.c.bf16 %v283, %v275
            %v340 = vpack.c.bf16 %v284, %v276
            %v341 = vpack.c.bf16 %v293, %v285
            %v342 = vpack.c.bf16 %v294, %v286
            %v343 = vpack.c.bf16 %v295, %v287
            %v344 = vpack.c.bf16 %v296, %v288
            %v345 = vpack.c.bf16 %v297, %v289
            %v346 = vpack.c.bf16 %v298, %v290
            %v347 = vpack.c.bf16 %v299, %v291
            %v348 = vpack.c.bf16 %v300, %v292
            %v349 = vpack.c.bf16 %v309, %v301
            %v350 = vpack.c.bf16 %v310, %v302
            %v351 = vpack.c.bf16 %v311, %v303
            %v352 = vpack.c.bf16 %v312, %v304
            %v353 = vpack.c.bf16 %v313, %v305
            %v354 = vpack.c.bf16 %v314, %v306
            %v355 = vpack.c.bf16 %v315, %v307
            %v356 = vpack.c.bf16 %v316, %v308
            %v357 = vpack.c.bf16 %v325, %v317
            %v358 = vpack.c.bf16 %v326, %v318
            %v359 = vpack.c.bf16 %v327, %v319
            %v360 = vpack.c.bf16 %v328, %v320
            %v361 = vpack.c.bf16 %v329, %v321
            %v362 = vpack.c.bf16 %v330, %v322
            %v363 = vpack.c.bf16 %v331, %v323
            %v364 = vpack.c.bf16 %v332, %v324
            %v365 = vld [vmem:[%s2] sm:$0xf]
            %v366 = vld [vmem:[%s2 + $0x4] sm:$0xf]
            %v367 = vld [vmem:[%s2 + $0x8] sm:$0xf]
            %v368 = vld [vmem:[%s2 + $0xc] sm:$0xf]
            %v369 = vld [vmem:[%s2 + $0x10] sm:$0xf]
            %v370 = vld [vmem:[%s2 + $0x14] sm:$0xf]
            %v377 = vunpack.c.l.b16 %v365
            %v378 = vunpack.c.l.b16 %v366
            %v379 = vunpack.c.l.b16 %v367
            %v380 = vunpack.c.l.b16 %v368
            %v381 = vunpack.c.l.b16 %v369
            %v382 = vunpack.c.l.b16 %v370
            %v383 = vpack.c.b16 %v378, %v377
            %v384 = vpack.c.b16 %v380, %v379
            %v385 = vpack.c.b16 %v382, %v381
            %vm386 = vcmask 523264
            %v388 = vsel %vm386, %v383, 0
            %v391 = vsel %vm386, %v384, 0
            %v394 = vsel %vm386, %v385, 0
            %396 = vmatpush.bf16.msra.mxu0 0
            %397 = vmatpush.bf16.msra.mxu0 0
            %398 = vmatpush.bf16.msra.mxu0 0
            %399 = vmatpush.bf16.msra.mxu0 0
            %400 = vmatpush.bf16.msra.mxu0 %v357
            %401 = vmatpush.bf16.msra.mxu0 %v349
            %402 = vmatpush.bf16.msra.mxu0 %v341
            %403 = vmatpush.bf16.msra.mxu0 %v333
            %404 = vmatmul.bf16.gmra.mxu0 %v388
            %v405 = vpop.f32.mrf.mxu0
            %v406 = vadd.f32 0.0, %v405
            %v407 = vpop.f32.mrf.mxu0
            %v408 = vadd.f32 0.0, %v407
            %409 = vmatmul.bf16.gmra.mxu0 %v391
            %v410 = vpop.f32.mrf.mxu0
            %v411 = vadd.f32 0.0, %v410
            %v412 = vpop.f32.mrf.mxu0
            %v413 = vadd.f32 0.0, %v412
            %414 = vmatmul.bf16.gmra.mxu0 %v394
            %v415 = vpop.f32.mrf.mxu0
            %v416 = vadd.f32 0.0, %v415
            %v417 = vpop.f32.mrf.mxu0
            %v418 = vadd.f32 0.0, %v417
            %419 = vdwg.mxu0
            %420 = vmatpush.bf16.msra.mxu0 0
            %421 = vmatpush.bf16.msra.mxu0 0
            %422 = vmatpush.bf16.msra.mxu0 0
            %423 = vmatpush.bf16.msra.mxu0 0
            %424 = vmatpush.bf16.msra.mxu0 %v358
            %425 = vmatpush.bf16.msra.mxu0 %v350
            %426 = vmatpush.bf16.msra.mxu0 %v342
            %427 = vmatpush.bf16.msra.mxu0 %v334
            %428 = vmatmul.bf16.gmra.mxu0 %v388
            %v429 = vpop.f32.mrf.mxu0
            %v430 = vadd.f32 0.0, %v429
            %v431 = vpop.f32.mrf.mxu0
            %v432 = vadd.f32 0.0, %v431
            %433 = vmatmul.bf16.gmra.mxu0 %v391
            %v434 = vpop.f32.mrf.mxu0
            %v435 = vadd.f32 0.0, %v434
            %v436 = vpop.f32.mrf.mxu0
            %v437 = vadd.f32 0.0, %v436
            %438 = vmatmul.bf16.gmra.mxu0 %v394
            %v439 = vpop.f32.mrf.mxu0
            %v440 = vadd.f32 0.0, %v439
            %v441 = vpop.f32.mrf.mxu0
            %v442 = vadd.f32 0.0, %v441
            %443 = vdwg.mxu0
            %444 = vmatpush.bf16.msra.mxu0 0
            %445 = vmatpush.bf16.msra.mxu0 0
            %446 = vmatpush.bf16.msra.mxu0 0
            %447 = vmatpush.bf16.msra.mxu0 0
            %448 = vmatpush.bf16.msra.mxu0 %v359
            %449 = vmatpush.bf16.msra.mxu0 %v351
            %450 = vmatpush.bf16.msra.mxu0 %v343
            %451 = vmatpush.bf16.msra.mxu0 %v335
            %452 = vmatmul.bf16.gmra.mxu0 %v388
            %v453 = vpop.f32.mrf.mxu0
            %v454 = vadd.f32 0.0, %v453
            %v455 = vpop.f32.mrf.mxu0
            %v456 = vadd.f32 0.0, %v455
            %457 = vmatmul.bf16.gmra.mxu0 %v391
            %v458 = vpop.f32.mrf.mxu0
            %v459 = vadd.f32 0.0, %v458
            %v460 = vpop.f32.mrf.mxu0
            %v461 = vadd.f32 0.0, %v460
            %462 = vmatmul.bf16.gmra.mxu0 %v394
            %v463 = vpop.f32.mrf.mxu0
            %v464 = vadd.f32 0.0, %v463
            %v465 = vpop.f32.mrf.mxu0
            %v466 = vadd.f32 0.0, %v465
            %467 = vdwg.mxu0
            %468 = vmatpush.bf16.msra.mxu0 0
            %469 = vmatpush.bf16.msra.mxu0 0
            %470 = vmatpush.bf16.msra.mxu0 0
            %471 = vmatpush.bf16.msra.mxu0 0
            %472 = vmatpush.bf16.msra.mxu0 %v360
            %473 = vmatpush.bf16.msra.mxu0 %v352
            %474 = vmatpush.bf16.msra.mxu0 %v344
            %475 = vmatpush.bf16.msra.mxu0 %v336
            %476 = vmatmul.bf16.gmra.mxu0 %v388
            %v477 = vpop.f32.mrf.mxu0
            %v478 = vadd.f32 0.0, %v477
            %v479 = vpop.f32.mrf.mxu0
            %v480 = vadd.f32 0.0, %v479
            %481 = vmatmul.bf16.gmra.mxu0 %v391
            %v482 = vpop.f32.mrf.mxu0
            %v483 = vadd.f32 0.0, %v482
            %v484 = vpop.f32.mrf.mxu0
            %v485 = vadd.f32 0.0, %v484
            %486 = vmatmul.bf16.gmra.mxu0 %v394
            %v487 = vpop.f32.mrf.mxu0
            %v488 = vadd.f32 0.0, %v487
            %v489 = vpop.f32.mrf.mxu0
            %v490 = vadd.f32 0.0, %v489
            %491 = vdwg.mxu0
            %492 = vmatpush.bf16.msra.mxu0 0
            %493 = vmatpush.bf16.msra.mxu0 0
            %494 = vmatpush.bf16.msra.mxu0 0
            %495 = vmatpush.bf16.msra.mxu0 0
            %496 = vmatpush.bf16.msra.mxu0 %v361
            %497 = vmatpush.bf16.msra.mxu0 %v353
            %498 = vmatpush.bf16.msra.mxu0 %v345
            %499 = vmatpush.bf16.msra.mxu0 %v337
            %500 = vmatmul.bf16.gmra.mxu0 %v388
            %v501 = vpop.f32.mrf.mxu0
            %v502 = vadd.f32 0.0, %v501
            %v503 = vpop.f32.mrf.mxu0
            %v504 = vadd.f32 0.0, %v503
            %505 = vmatmul.bf16.gmra.mxu0 %v391
            %v506 = vpop.f32.mrf.mxu0
            %v507 = vadd.f32 0.0, %v506
            %v508 = vpop.f32.mrf.mxu0
            %v509 = vadd.f32 0.0, %v508
            %510 = vmatmul.bf16.gmra.mxu0 %v394
            %v511 = vpop.f32.mrf.mxu0
            %v512 = vadd.f32 0.0, %v511
            %v513 = vpop.f32.mrf.mxu0
            %v514 = vadd.f32 0.0, %v513
            %515 = vdwg.mxu0
            %516 = vmatpush.bf16.msra.mxu0 0
            %517 = vmatpush.bf16.msra.mxu0 0
            %518 = vmatpush.bf16.msra.mxu0 0
            %519 = vmatpush.bf16.msra.mxu0 0
            %520 = vmatpush.bf16.msra.mxu0 %v362
            %521 = vmatpush.bf16.msra.mxu0 %v354
            %522 = vmatpush.bf16.msra.mxu0 %v346
            %523 = vmatpush.bf16.msra.mxu0 %v338
            %524 = vmatmul.bf16.gmra.mxu0 %v388
            %v525 = vpop.f32.mrf.mxu0
            %v526 = vadd.f32 0.0, %v525
            %v527 = vpop.f32.mrf.mxu0
            %v528 = vadd.f32 0.0, %v527
            %529 = vmatmul.bf16.gmra.mxu0 %v391
            %v530 = vpop.f32.mrf.mxu0
            %v531 = vadd.f32 0.0, %v530
            %v532 = vpop.f32.mrf.mxu0
            %v533 = vadd.f32 0.0, %v532
            %534 = vmatmul.bf16.gmra.mxu0 %v394
            %v535 = vpop.f32.mrf.mxu0
            %v536 = vadd.f32 0.0, %v535
            %v537 = vpop.f32.mrf.mxu0
            %v538 = vadd.f32 0.0, %v537
            %539 = vdwg.mxu0
            %540 = vmatpush.bf16.msra.mxu0 0
            %541 = vmatpush.bf16.msra.mxu0 0
            %542 = vmatpush.bf16.msra.mxu0 0
            %543 = vmatpush.bf16.msra.mxu0 0
            %544 = vmatpush.bf16.msra.mxu0 %v363
            %545 = vmatpush.bf16.msra.mxu0 %v355
            %546 = vmatpush.bf16.msra.mxu0 %v347
            %547 = vmatpush.bf16.msra.mxu0 %v339
            %548 = vmatmul.bf16.gmra.mxu0 %v388
            %v549 = vpop.f32.mrf.mxu0
            %v550 = vadd.f32 0.0, %v549
            %v551 = vpop.f32.mrf.mxu0
            %v552 = vadd.f32 0.0, %v551
            %553 = vmatmul.bf16.gmra.mxu0 %v391
            %v554 = vpop.f32.mrf.mxu0
            %v555 = vadd.f32 0.0, %v554
            %v556 = vpop.f32.mrf.mxu0
            %v557 = vadd.f32 0.0, %v556
            %558 = vmatmul.bf16.gmra.mxu0 %v394
            %v559 = vpop.f32.mrf.mxu0
            %v560 = vadd.f32 0.0, %v559
            %v561 = vpop.f32.mrf.mxu0
            %v562 = vadd.f32 0.0, %v561
            %563 = vdwg.mxu0
            %564 = vmatpush.bf16.msra.mxu0 0
            %565 = vmatpush.bf16.msra.mxu0 0
            %566 = vmatpush.bf16.msra.mxu0 0
            %567 = vmatpush.bf16.msra.mxu0 0
            %568 = vmatpush.bf16.msra.mxu0 %v364
            %569 = vmatpush.bf16.msra.mxu0 %v356
            %570 = vmatpush.bf16.msra.mxu0 %v348
            %571 = vmatpush.bf16.msra.mxu0 %v340
            %572 = vmatmul.bf16.gmra.mxu0 %v388
            %v573 = vpop.f32.mrf.mxu0
            %v574 = vadd.f32 0.0, %v573
            %v575 = vpop.f32.mrf.mxu0
            %v576 = vadd.f32 0.0, %v575
            %577 = vmatmul.bf16.gmra.mxu0 %v391
            %v578 = vpop.f32.mrf.mxu0
            %v579 = vadd.f32 0.0, %v578
            %v580 = vpop.f32.mrf.mxu0
            %v581 = vadd.f32 0.0, %v580
            %582 = vmatmul.bf16.gmra.mxu0 %v394
            %v583 = vpop.f32.mrf.mxu0
            %v584 = vadd.f32 0.0, %v583
            %v585 = vpop.f32.mrf.mxu0
            %v586 = vadd.f32 0.0, %v585
            %587 = vdwg.mxu0
            %v588 = vpack.c.bf16 %v430, %v406
            %v589 = vpack.c.bf16 %v478, %v454
            %v590 = vpack.c.bf16 %v526, %v502
            %v591 = vpack.c.bf16 %v574, %v550
            %592 = vst [vmem:[#allocation2] sm:$0xff] %v588
            %593 = vst [vmem:[#allocation2 + $0x8] sm:$0xff] %v589
            %594 = vst [vmem:[#allocation2 + $0x10] sm:$0xff] %v590
            %595 = vst [vmem:[#allocation2 + $0x18] sm:$0xff] %v591
            %v596 = vmax.f32 %v408, %v456
            %v597 = vmax.f32 %v432, %v480
            %v598 = vmax.f32 %v596, %v504
            %v599 = vmax.f32 %v597, %v528
            %v600 = vmax.f32 %v598, %v552
            %v601 = vmax.f32 %v599, %v576
            %v602 = vpack.c.bf16 %v601, %v600
            %603 = vst [vmem:[#allocation3] sm:$0xff] %v602
            %v604 = vmax.f32 %v411, %v459
            %v605 = vmax.f32 %v435, %v483
            %v606 = vmax.f32 %v413, %v461
            %v607 = vmax.f32 %v437, %v485
            %v608 = vmax.f32 %v416, %v464
            %v609 = vmax.f32 %v440, %v488
            %v610 = vmax.f32 %v418, %v466
            %v611 = vmax.f32 %v442, %v490
            %v612 = vmax.f32 %v604, %v507
            %v613 = vmax.f32 %v605, %v531
            %v614 = vmax.f32 %v606, %v509
            %v615 = vmax.f32 %v607, %v533
            %v616 = vmax.f32 %v608, %v512
            %v617 = vmax.f32 %v609, %v536
            %v618 = vmax.f32 %v610, %v514
            %v619 = vmax.f32 %v611, %v538
            %v620 = vmax.f32 %v612, %v555
            %v621 = vmax.f32 %v613, %v579
            %v622 = vmax.f32 %v614, %v557
            %v623 = vmax.f32 %v615, %v581
            %v624 = vmax.f32 %v616, %v560
            %v625 = vmax.f32 %v617, %v584
            %v626 = vmax.f32 %v618, %v562
            %v627 = vmax.f32 %v619, %v586
            %v628 = vpack.c.bf16 %v621, %v620
            %v629 = vpack.c.bf16 %v623, %v622
            %v630 = vpack.c.bf16 %v625, %v624
            %v631 = vpack.c.bf16 %v627, %v626
            %632 = vst [vmem:[#allocation4] sm:$0xff] %v628
            %633 = vst [vmem:[#allocation4 + $0x8] sm:$0xff] %v629
            %634 = vst [vmem:[#allocation4 + $0x10] sm:$0xff] %v630
            %635 = vst [vmem:[#allocation4 + $0x18] sm:$0xff] %v631
          $region52: #{tpu_custom_call.1} parent=47 // pred_fallthru
            _
          %s636 = smul.addr %s235, 4
          %s637 = scalar_lea.vmem [#allocation2], %s636
          %v638 = vld [vmem:[%s637] sm:$0xf]
          %v639 = vld [vmem:[#allocation3] sm:$0xff]
          %v641 = vunpack.c.l.b16 %v639
          %v642 = vunpack.c.h.b16 %v639
          %v643 = vpack.c.b16 %v641, %v641
          %v644 = vpack.c.b16 %v642, %v642
          %647 = vxpose.binary.xlu0.c.b16.start [1/16] %v644, %v643, 128
          %648 = vxpose.binary.xlu0.c.b16.cont [2/16] 0, 0, 128
          %649 = vxpose.binary.xlu0.c.b16.cont [3/16] 0, 0, 128
          %650 = vxpose.binary.xlu0.c.b16.cont [4/16] 0, 0, 128
          %651 = vxpose.binary.xlu0.c.b16.cont [5/16] 0, 0, 128
          %652 = vxpose.binary.xlu0.c.b16.cont [6/16] 0, 0, 128
          %653 = vxpose.binary.xlu0.c.b16.cont [7/16] 0, 0, 128
          %654 = vxpose.binary.xlu0.c.b16.end [8/16] 0, 0, 128
          %v655 = vpop.trf.xlu0
          %v656 = vpop.trf.xlu0
          %v657 = vpop.trf.xlu0
          %v658 = vpop.trf.xlu0
          %v659 = vpop.trf.xlu0
          %v660 = vpop.trf.xlu0
          %v661 = vpop.trf.xlu0
          %v662 = vpop.trf.xlu0
          %v663 = vpop.trf.xlu0
          %v664 = vpop.trf.xlu0
          %v665 = vpop.trf.xlu0
          %v666 = vpop.trf.xlu0
          %v667 = vpop.trf.xlu0
          %v668 = vpop.trf.xlu0
          %v669 = vpop.trf.xlu0
          %v670 = vpop.trf.xlu0
          %vm671 = vcmask 64512
          %v673 = vsel %vm671, %v655, 0
          %v676 = vsel %vm671, %v657, 0
          %v679 = vsel %vm671, %v659, 0
          %v682 = vsel %vm671, %v661, 0
          %v685 = vsel %vm671, %v663, 0
          %v688 = vsel %vm671, %v665, 0
          %v691 = vsel %vm671, %v667, 0
          %v694 = vsel %vm671, %v669, 0
          %v697 = vsel %vm671, %v656, 0
          %v700 = vsel %vm671, %v658, 0
          %v703 = vsel %vm671, %v660, 0
          %v706 = vsel %vm671, %v662, 0
          %v709 = vsel %vm671, %v664, 0
          %v712 = vsel %vm671, %v666, 0
          %v715 = vsel %vm671, %v668, 0
          %v718 = vsel %vm671, %v670, 0
          %vm720 = vcmask 1043456
          %v722 = vsel %vm720, %v638, 0
          %724 = vmatpush.bf16.msra.mxu0 0
          %725 = vmatpush.bf16.msra.mxu0 0
          %726 = vmatpush.bf16.msra.mxu0 0
          %727 = vmatpush.bf16.msra.mxu0 0
          %728 = vmatpush.bf16.msra.mxu0 0
          %729 = vmatpush.bf16.msra.mxu0 0
          %730 = vmatpush.bf16.msra.mxu0 0
          %731 = vmatpush.bf16.msra.mxu0 %v722
          %732 = vmatmul.bf16.gmra.mxu0 %v673
          %v733 = vpop.f32.mrf.mxu0
          %v734 = vadd.f32 0.0, %v733
          %v735 = vpop.f32.mrf.mxu0
          %v736 = vadd.f32 0.0, %v735
          %737 = vmatmul.bf16.gmra.mxu0 %v676
          %v738 = vpop.f32.mrf.mxu0
          %v739 = vadd.f32 0.0, %v738
          %v740 = vpop.f32.mrf.mxu0
          %v741 = vadd.f32 0.0, %v740
          %742 = vmatmul.bf16.gmra.mxu0 %v679
          %v743 = vpop.f32.mrf.mxu0
          %v744 = vadd.f32 0.0, %v743
          %v745 = vpop.f32.mrf.mxu0
          %v746 = vadd.f32 0.0, %v745
          %747 = vmatmul.bf16.gmra.mxu0 %v682
          %v748 = vpop.f32.mrf.mxu0
          %v749 = vadd.f32 0.0, %v748
          %v750 = vpop.f32.mrf.mxu0
          %v751 = vadd.f32 0.0, %v750
          %752 = vmatmul.bf16.gmra.mxu0 %v685
          %v753 = vpop.f32.mrf.mxu0
          %v754 = vadd.f32 0.0, %v753
          %v755 = vpop.f32.mrf.mxu0
          %v756 = vadd.f32 0.0, %v755
          %757 = vmatmul.bf16.gmra.mxu0 %v688
          %v758 = vpop.f32.mrf.mxu0
          %v759 = vadd.f32 0.0, %v758
          %v760 = vpop.f32.mrf.mxu0
          %v761 = vadd.f32 0.0, %v760
          %762 = vmatmul.bf16.gmra.mxu0 %v691
          %v763 = vpop.f32.mrf.mxu0
          %v764 = vadd.f32 0.0, %v763
          %v765 = vpop.f32.mrf.mxu0
          %v766 = vadd.f32 0.0, %v765
          %767 = vmatmul.bf16.gmra.mxu0 %v694
          %v768 = vpop.f32.mrf.mxu0
          %v769 = vadd.f32 0.0, %v768
          %v770 = vpop.f32.mrf.mxu0
          %v771 = vadd.f32 0.0, %v770
          %772 = vmatmul.bf16.gmra.mxu0 %v697
          %v773 = vpop.f32.mrf.mxu0
          %v774 = vadd.f32 0.0, %v773
          %v775 = vpop.f32.mrf.mxu0
          %v776 = vadd.f32 0.0, %v775
          %777 = vmatmul.bf16.gmra.mxu0 %v700
          %v778 = vpop.f32.mrf.mxu0
          %v779 = vadd.f32 0.0, %v778
          %v780 = vpop.f32.mrf.mxu0
          %v781 = vadd.f32 0.0, %v780
          %782 = vmatmul.bf16.gmra.mxu0 %v703
          %v783 = vpop.f32.mrf.mxu0
          %v784 = vadd.f32 0.0, %v783
          %v785 = vpop.f32.mrf.mxu0
          %v786 = vadd.f32 0.0, %v785
          %787 = vmatmul.bf16.gmra.mxu0 %v706
          %v788 = vpop.f32.mrf.mxu0
          %v789 = vadd.f32 0.0, %v788
          %v790 = vpop.f32.mrf.mxu0
          %v791 = vadd.f32 0.0, %v790
          %792 = vmatmul.bf16.gmra.mxu0 %v709
          %v793 = vpop.f32.mrf.mxu0
          %v794 = vadd.f32 0.0, %v793
          %v795 = vpop.f32.mrf.mxu0
          %v796 = vadd.f32 0.0, %v795
          %797 = vmatmul.bf16.gmra.mxu0 %v712
          %v798 = vpop.f32.mrf.mxu0
          %v799 = vadd.f32 0.0, %v798
          %v800 = vpop.f32.mrf.mxu0
          %v801 = vadd.f32 0.0, %v800
          %802 = vmatmul.bf16.gmra.mxu0 %v715
          %v803 = vpop.f32.mrf.mxu0
          %v804 = vadd.f32 0.0, %v803
          %v805 = vpop.f32.mrf.mxu0
          %v806 = vadd.f32 0.0, %v805
          %807 = vmatmul.bf16.gmra.mxu0 %v718
          %v808 = vpop.f32.mrf.mxu0
          %v809 = vadd.f32 0.0, %v808
          %v810 = vpop.f32.mrf.mxu0
          %v811 = vadd.f32 0.0, %v810
          %812 = vdwg.mxu0
          %v813 = vmax.f32 %v734, %v744
          %v814 = vmax.f32 %v736, %v746
          %v815 = vmax.f32 %v739, %v749
          %v816 = vmax.f32 %v741, %v751
          %v817 = vmax.f32 %v813, %v754
          %v818 = vmax.f32 %v814, %v756
          %v819 = vmax.f32 %v815, %v759
          %v820 = vmax.f32 %v816, %v761
          %v821 = vmax.f32 %v817, %v764
          %v822 = vmax.f32 %v818, %v766
          %v823 = vmax.f32 %v819, %v769
          %v824 = vmax.f32 %v820, %v771
          %v825 = vmax.f32 %v821, %v774
          %v826 = vmax.f32 %v822, %v776
          %v827 = vmax.f32 %v823, %v779
          %v828 = vmax.f32 %v824, %v781
          %v829 = vmax.f32 %v825, %v784
          %v830 = vmax.f32 %v826, %v786
          %v831 = vmax.f32 %v827, %v789
          %v832 = vmax.f32 %v828, %v791
          %v833 = vmax.f32 %v829, %v794
          %v834 = vmax.f32 %v830, %v796
          %v835 = vmax.f32 %v831, %v799
          %v836 = vmax.f32 %v832, %v801
          %v837 = vmax.f32 %v833, %v804
          %v838 = vmax.f32 %v834, %v806
          %v839 = vmax.f32 %v835, %v809
          %v840 = vmax.f32 %v836, %v811
          %v841 = vmax.f32 %v837, %v838
          %v842 = vmax.f32 %v839, %v840
          %v843 = vmax.f32 %v841, %v842
          %v844 = vrot.slane %v843, 4
          %v845 = vmax.f32 %v843, %v844
          %v846 = vrot.slane %v845, 2
          %v847 = vmax.f32 %v845, %v846
          %v848 = vrot.slane %v847, 1
          %v849 = vmax.f32 %v847, %v848
          %v850 = vsub.f32 %v734, %v849
          %v851 = vsub.f32 %v736, %v849
          %v852 = vsub.f32 %v739, %v849
          %v853 = vsub.f32 %v741, %v849
          %v854 = vsub.f32 %v744, %v849
          %v855 = vsub.f32 %v746, %v849
          %v856 = vsub.f32 %v749, %v849
          %v857 = vsub.f32 %v751, %v849
          %v858 = vsub.f32 %v754, %v849
          %v859 = vsub.f32 %v756, %v849
          %v860 = vsub.f32 %v759, %v849
          %v861 = vsub.f32 %v761, %v849
          %v862 = vsub.f32 %v764, %v849
          %v863 = vsub.f32 %v766, %v849
          %v864 = vsub.f32 %v769, %v849
          %v865 = vsub.f32 %v771, %v849
          %v866 = vsub.f32 %v774, %v849
          %v867 = vsub.f32 %v776, %v849
          %v868 = vsub.f32 %v779, %v849
          %v869 = vsub.f32 %v781, %v849
          %v870 = vsub.f32 %v784, %v849
          %v871 = vsub.f32 %v786, %v849
          %v872 = vsub.f32 %v789, %v849
          %v873 = vsub.f32 %v791, %v849
          %v874 = vsub.f32 %v794, %v849
          %v875 = vsub.f32 %v796, %v849
          %v876 = vsub.f32 %v799, %v849
          %v877 = vsub.f32 %v801, %v849
          %v878 = vsub.f32 %v804, %v849
          %v879 = vsub.f32 %v806, %v849
          %v880 = vsub.f32 %v809, %v849
          %v881 = vsub.f32 %v811, %v849
          %v882 = vmul.f32 %v850, 1.442695
          %v883 = vpow.pop %v882
          %v884 = vmul.f32 %v851, 1.442695
          %v885 = vpow.pop %v884
          %v886 = vmul.f32 %v852, 1.442695
          %v887 = vpow.pop %v886
          %v888 = vmul.f32 %v853, 1.442695
          %v889 = vpow.pop %v888
          %v890 = vmul.f32 %v854, 1.442695
          %v891 = vpow.pop %v890
          %v892 = vmul.f32 %v855, 1.442695
          %v893 = vpow.pop %v892
          %v894 = vmul.f32 %v856, 1.442695
          %v895 = vpow.pop %v894
          %v896 = vmul.f32 %v857, 1.442695
          %v897 = vpow.pop %v896
          %v898 = vmul.f32 %v858, 1.442695
          %v899 = vpow.pop %v898
          %v900 = vmul.f32 %v859, 1.442695
          %v901 = vpow.pop %v900
          %v902 = vmul.f32 %v860, 1.442695
          %v903 = vpow.pop %v902
          %v904 = vmul.f32 %v861, 1.442695
          %v905 = vpow.pop %v904
          %v906 = vmul.f32 %v862, 1.442695
          %v907 = vpow.pop %v906
          %v908 = vmul.f32 %v863, 1.442695
          %v909 = vpow.pop %v908
          %v910 = vmul.f32 %v864, 1.442695
          %v911 = vpow.pop %v910
          %v912 = vmul.f32 %v865, 1.442695
          %v913 = vpow.pop %v912
          %v914 = vmul.f32 %v866, 1.442695
          %v915 = vpow.pop %v914
          %v916 = vmul.f32 %v867, 1.442695
          %v917 = vpow.pop %v916
          %v918 = vmul.f32 %v868, 1.442695
          %v919 = vpow.pop %v918
          %v920 = vmul.f32 %v869, 1.442695
          %v921 = vpow.pop %v920
          %v922 = vmul.f32 %v870, 1.442695
          %v923 = vpow.pop %v922
          %v924 = vmul.f32 %v871, 1.442695
          %v925 = vpow.pop %v924
          %v926 = vmul.f32 %v872, 1.442695
          %v927 = vpow.pop %v926
          %v928 = vmul.f32 %v873, 1.442695
          %v929 = vpow.pop %v928
          %v930 = vmul.f32 %v874, 1.442695
          %v931 = vpow.pop %v930
          %v932 = vmul.f32 %v875, 1.442695
          %v933 = vpow.pop %v932
          %v934 = vmul.f32 %v876, 1.442695
          %v935 = vpow.pop %v934
          %v936 = vmul.f32 %v877, 1.442695
          %v937 = vpow.pop %v936
          %v938 = vmul.f32 %v878, 1.442695
          %v939 = vpow.pop %v938
          %v940 = vmul.f32 %v879, 1.442695
          %v941 = vpow.pop %v940
          %v942 = vmul.f32 %v880, 1.442695
          %v943 = vpow.pop %v942
          %v944 = vmul.f32 %v881, 1.442695
          %v945 = vpow.pop %v944
          %v946 = vadd.f32 %v883, %v885
          %v947 = vadd.f32 %v946, %v887
          %v948 = vadd.f32 %v947, %v889
          %v949 = vadd.f32 %v948, %v891
          %v950 = vadd.f32 %v949, %v893
          %v951 = vadd.f32 %v950, %v895
          %v952 = vadd.f32 %v951, %v897
          %v953 = vadd.f32 %v952, %v899
          %v954 = vadd.f32 %v953, %v901
          %v955 = vadd.f32 %v954, %v903
          %v956 = vadd.f32 %v955, %v905
          %v957 = vadd.f32 %v956, %v907
          %v958 = vadd.f32 %v957, %v909
          %v959 = vadd.f32 %v958, %v911
          %v960 = vadd.f32 %v959, %v913
          %v961 = vadd.f32 %v960, %v915
          %v962 = vadd.f32 %v961, %v917
          %v963 = vadd.f32 %v962, %v919
          %v964 = vadd.f32 %v963, %v921
          %v965 = vadd.f32 %v964, %v923
          %v966 = vadd.f32 %v965, %v925
          %v967 = vadd.f32 %v966, %v927
          %v968 = vadd.f32 %v967, %v929
          %v969 = vadd.f32 %v968, %v931
          %v970 = vadd.f32 %v969, %v933
          %v971 = vadd.f32 %v970, %v935
          %v972 = vadd.f32 %v971, %v937
          %v973 = vadd.f32 %v972, %v939
          %v974 = vadd.f32 %v973, %v941
          %v975 = vadd.f32 %v974, %v943
          %v976 = vadd.f32 %v975, %v945
          %v977 = vrot.slane %v976, 4
          %v978 = vadd.f32 %v976, %v977
          %v979 = vrot.slane %v978, 2
          %v980 = vadd.f32 %v978, %v979
          %v981 = vrot.slane %v980, 1
          %v982 = vadd.f32 %v980, %v981
          %v983 = vld [vmem:[#allocation4] sm:$0xff]
          %v984 = vld [vmem:[#allocation4 + $0x8] sm:$0xff]
          %v985 = vld [vmem:[#allocation4 + $0x10] sm:$0xff]
          %v986 = vld [vmem:[#allocation4 + $0x18] sm:$0xff]
          %v987 = vpack.c.bf16 %v885, %v883
          %v988 = vpack.c.bf16 %v889, %v887
          %v989 = vpack.c.bf16 %v893, %v891
          %v990 = vpack.c.bf16 %v897, %v895
          %v991 = vpack.c.bf16 %v901, %v899
          %v992 = vpack.c.bf16 %v905, %v903
          %v993 = vpack.c.bf16 %v909, %v907
          %v994 = vpack.c.bf16 %v913, %v911
          %v995 = vpack.c.bf16 %v917, %v915
          %v996 = vpack.c.bf16 %v921, %v919
          %v997 = vpack.c.bf16 %v925, %v923
          %v998 = vpack.c.bf16 %v929, %v927
          %v999 = vpack.c.bf16 %v933, %v931
          %v1000 = vpack.c.bf16 %v937, %v935
          %v1001 = vpack.c.bf16 %v941, %v939
          %v1002 = vpack.c.bf16 %v945, %v943
          %v1007 = vunpack.c.l.b16 %v983
          %v1008 = vunpack.c.h.b16 %v983
          %v1009 = vunpack.c.l.b16 %v984
          %v1010 = vunpack.c.h.b16 %v984
          %v1011 = vunpack.c.l.b16 %v985
          %v1012 = vunpack.c.h.b16 %v985
          %v1013 = vunpack.c.l.b16 %v986
          %v1014 = vunpack.c.h.b16 %v986
          %v1015 = vpack.c.b16 %v1009, %v1007
          %v1016 = vpack.c.b16 %v1010, %v1008
          %v1017 = vpack.c.b16 %v1013, %v1011
          %v1018 = vpack.c.b16 %v1014, %v1012
          %1023 = vmatpush.bf16.msra.mxu0 %v994
          %1024 = vmatpush.bf16.msra.mxu0 %v993
          %1025 = vmatpush.bf16.msra.mxu0 %v992
          %1026 = vmatpush.bf16.msra.mxu0 %v991
          %1027 = vmatpush.bf16.msra.mxu0 %v990
          %1028 = vmatpush.bf16.msra.mxu0 %v989
          %1029 = vmatpush.bf16.msra.mxu0 %v988
          %1030 = vmatpush.bf16.msra.mxu0 %v987
          %1031 = vmatmul.bf16.gmra.mxu0 %v1015
          %v1032 = vpop.f32.mrf.mxu0
          %v1033 = vadd.f32 0.0, %v1032
          %v1034 = vpop.f32.mrf.mxu0
          %v1035 = vadd.f32 0.0, %v1034
          %1036 = vmatmul.bf16.gmra.mxu0 %v1017
          %v1037 = vpop.f32.mrf.mxu0
          %v1038 = vadd.f32 0.0, %v1037
          %v1039 = vpop.f32.mrf.mxu0
          %v1040 = vadd.f32 0.0, %v1039
          %1041 = vdwg.mxu0
          %1042 = vmatpush.bf16.msra.mxu0 %v1002
          %1043 = vmatpush.bf16.msra.mxu0 %v1001
          %1044 = vmatpush.bf16.msra.mxu0 %v1000
          %1045 = vmatpush.bf16.msra.mxu0 %v999
          %1046 = vmatpush.bf16.msra.mxu0 %v998
          %1047 = vmatpush.bf16.msra.mxu0 %v997
          %1048 = vmatpush.bf16.msra.mxu0 %v996
          %1049 = vmatpush.bf16.msra.mxu0 %v995
          %1050 = vmatmul.bf16.gmra.mxu0 %v1016
          %v1051 = vpop.f32.mrf.mxu0
          %v1052 = vadd.f32 %v1033, %v1051
          %v1053 = vpop.f32.mrf.mxu0
          %v1054 = vadd.f32 %v1035, %v1053
          %1055 = vmatmul.bf16.gmra.mxu0 %v1018
          %v1056 = vpop.f32.mrf.mxu0
          %v1057 = vadd.f32 %v1038, %v1056
          %v1058 = vpop.f32.mrf.mxu0
          %v1059 = vadd.f32 %v1040, %v1058
          %1060 = vdwg.mxu0
          %v1061 = vrcp.pop %v982
          %v1062 = vmul.f32 %v1052, %v1061
          %v1063 = vmul.f32 %v1054, %v1061
          %v1064 = vmul.f32 %v1057, %v1061
          %v1065 = vmul.f32 %v1059, %v1061
          %v1066 = vld [vmem:[%s3] sm:$0xf]
          %v1067 = vld [vmem:[%s3 + $0x4] sm:$0xf]
          %v1068 = vld [vmem:[%s3 + $0x8] sm:$0xf]
          %v1069 = vld [vmem:[%s3 + $0xc] sm:$0xf]
          %v1070 = vld [vmem:[%s3 + $0x10] sm:$0xf]
          %v1071 = vld [vmem:[%s3 + $0x14] sm:$0xf]
          %v1072 = vld [vmem:[%s3 + $0x18] sm:$0xf]
          %v1073 = vld [vmem:[%s3 + $0x1c] sm:$0xf]
          %v1074 = vpack.c.bf16 %v1063, %v1062
          %v1075 = vpack.c.bf16 %v1065, %v1064
          %v1084 = vunpack.c.l.b16 %v1066
          %v1085 = vunpack.c.l.b16 %v1067
          %v1086 = vunpack.c.l.b16 %v1068
          %v1087 = vunpack.c.l.b16 %v1069
          %v1088 = vunpack.c.l.b16 %v1070
          %v1089 = vunpack.c.l.b16 %v1071
          %v1090 = vunpack.c.l.b16 %v1072
          %v1091 = vunpack.c.l.b16 %v1073
          %v1092 = vpack.c.b16 %v1085, %v1084
          %v1093 = vpack.c.b16 %v1087, %v1086
          %v1094 = vpack.c.b16 %v1089, %v1088
          %v1095 = vpack.c.b16 %v1091, %v1090
          %vm1096 = vcmask 261120
          %v1098 = vsel %vm1096, %v1092, 0
          %v1101 = vsel %vm1096, %v1093, 0
          %v1104 = vsel %vm1096, %v1094, 0
          %v1107 = vsel %vm1096, %v1095, 0
          %1109 = vmatpush.bf16.msra.mxu0 0
          %1110 = vmatpush.bf16.msra.mxu0 0
          %1111 = vmatpush.bf16.msra.mxu0 0
          %1112 = vmatpush.bf16.msra.mxu0 0
          %1113 = vmatpush.bf16.msra.mxu0 0
          %1114 = vmatpush.bf16.msra.mxu0 0
          %1115 = vmatpush.bf16.msra.mxu0 %v1075
          %1116 = vmatpush.bf16.msra.mxu0 %v1074
          %1117 = vmatmul.bf16.gmra.mxu0 %v1098
          %v1118 = vpop.f32.mrf.mxu0
          %v1119 = vadd.f32 0.0, %v1118
          %v1120 = vpop.f32.mrf.mxu0
          %v1121 = vadd.f32 0.0, %v1120
          %1122 = vmatmul.bf16.gmra.mxu0 %v1101
          %v1123 = vpop.f32.mrf.mxu0
          %v1124 = vadd.f32 0.0, %v1123
          %v1125 = vpop.f32.mrf.mxu0
          %v1126 = vadd.f32 0.0, %v1125
          %1127 = vmatmul.bf16.gmra.mxu0 %v1104
          %v1128 = vpop.f32.mrf.mxu0
          %v1129 = vadd.f32 0.0, %v1128
          %v1130 = vpop.f32.mrf.mxu0
          %v1131 = vadd.f32 0.0, %v1130
          %1132 = vmatmul.bf16.gmra.mxu0 %v1107
          %v1133 = vpop.f32.mrf.mxu0
          %v1134 = vadd.f32 0.0, %v1133
          %v1135 = vpop.f32.mrf.mxu0
          %v1136 = vadd.f32 0.0, %v1135
          %1137 = vdwg.mxu0
          %s1138 = sld [smem:[#allocation5]]
          %v1139 = vstv %s1138
          %v1140 = vmul.f32 %v1139, %v1119
          %v1141 = vmul.f32 %v1139, %v1121
          %v1142 = vmul.f32 %v1139, %v1124
          %v1143 = vmul.f32 %v1139, %v1126
          %v1144 = vmul.f32 %v1139, %v1129
          %v1145 = vmul.f32 %v1139, %v1131
          %v1146 = vmul.f32 %v1139, %v1134
          %v1147 = vmul.f32 %v1139, %v1136
          %v1148 = vadd.f32 %v1140, %v239
          %v1149 = vadd.f32 %v1141, %v240
          %v1150 = vadd.f32 %v1142, %v241
          %v1151 = vadd.f32 %v1143, %v242
          %v1152 = vadd.f32 %v1144, %v243
          %v1153 = vadd.f32 %v1145, %v244
          %v1154 = vadd.f32 %v1146, %v245
          %v1155 = vadd.f32 %v1147, %v246
          %1156 = vst [vmem:[%s232] sm:$0xff] %v1148
          %1157 = vst [vmem:[%s232 + $0x8] sm:$0xff] %v1149
          %1158 = vst [vmem:[%s232 + $0x10] sm:$0xff] %v1150
          %1159 = vst [vmem:[%s232 + $0x18] sm:$0xff] %v1151
          %1160 = vst [vmem:[%s232 + $0x20] sm:$0xff] %v1152
          %1161 = vst [vmem:[%s232 + $0x28] sm:$0xff] %v1153
          %1162 = vst [vmem:[%s232 + $0x30] sm:$0xff] %v1154
          %1163 = vst [vmem:[%s232 + $0x38] sm:$0xff] %v1155
        $region48: #{tpu_custom_call.1} parent=35 // pred_fallthru
          _
        %s1164 = sand.u32 %s133, 1
        %s1165 = scalar_lea.sflag [#allocation8], %s1164
        %s1166 = sand.u32 %s133, 1
        %s1167 = smul.addr %s1166, 64
        %s1168 = scalar_lea.vmem [#allocation9], %s1167
        // Predicated region
        $region53: #{tpu_custom_call.1} parent=35 // pred_check
          %p1169 = pneg %p143
        $region54: #{tpu_custom_call.1} parent=35 // pred_check_branch
          %1171 = sbr.rel (%p1169) target = $region56
        $region55: #{tpu_custom_call.1} parent=35 // pred_region
          %1173 = vsyncadd %s1165, 0
          %s1174 = smul.addr %s26, 64
          %s1175 = sadd.s32 %s27, %s1174
          %s1176 = smul.addr %s1175, 8
          %s1177 = scalar_lea.hbm %s4, %s1176
          %s1178 = sshll.u32 %s1168, 4
          %s1179 = int_to_ptr.vmem [resolvable:$true] %s1178
          %s1180 = sshll.u32 %s1177, 4
          %s1181 = int_to_ptr.hbm [resolvable:$true] %s1180
          %1186 = dma.vmem_to_hbm [thread:$0]  %s1179, 1024, %s1181, %s1165, 128, 1024, 8
        $region56: #{tpu_custom_call.1} parent=35 // pred_fallthru
          _
      $region36: #{tpu_custom_call.1} parent=5 // pred_fallthru
        _
      %p1187 = scmp.le.s32.totalorder 2, %s17
      // Predicated region
      $region57: #{tpu_custom_call.1} parent=5 // pred_check
        %p1188 = pneg %p1187
      $region58: #{tpu_custom_call.1} parent=5 // pred_check_branch
        %1190 = sbr.rel (%p1188) target = $region60
      $region59: #{tpu_custom_call.1} parent=5 // pred_region
        %s1191 = ssub.s32 %s17, 2
        // Predicated region
        $region61: #{tpu_custom_call.1} parent=59 // pred_check
          %p1192 = pneg %p149
        $region62: #{tpu_custom_call.1} parent=59 // pred_check_branch
          %1194 = sbr.rel (%p1192) target = $region64
        $region63: #{tpu_custom_call.1} parent=59 // pred_region
          %s1195 = sand.u32 %s134, 1
          %s1196 = scalar_lea.sflag [#allocation8], %s1195
          %s1197 = sand.u32 %s134, 1
          %s1198 = smul.addr %s1197, 64
          %s1199 = scalar_lea.vmem [#allocation9], %s1198
          %1201 = dma.done %s1196, 1024
        $region64: #{tpu_custom_call.1} parent=59 // pred_fallthru
          _
      $region60: #{tpu_custom_call.1} parent=5 // pred_fallthru
        _
    $region6: #{tpu_custom_call.1} parent=1 // loop_footer
      %s21 = sadd.s32 1, %s17
    $region7: #{tpu_custom_call.1} parent=1 // loop_footer_branch
      %16 = sbr.rel target = $region3
    $region8: #{tpu_custom_call.1} parent=1 // loop_exit
      _
    %1202 = vsyncpa [#allocation7], 1
    %s1203 = scalar_lea.sflag [#allocation7], 1
    %1204 = vsyncpa %s1203, 1
    %1205 = vsyncpa [#allocation8], 1
    %s1206 = scalar_lea.sflag [#allocation8], 1
    %1207 = vsyncpa %s1206, 1

</llo_original>
